<compile_context>
chip_gen: v5e
topology: v5e:2x2
jax: 0.10.0
libtpu: 0.0.40
codegen_flags: <defaults>
</compile_context>

<pallas_src>
import jax
import jax.numpy as jnp
from jax.experimental import pallas as pl
from jax.experimental.pallas import tpu as pltpu


def _round_up(x, m):
    return ((x + m - 1) // m) * m


def mlp_kernel(x_ref, w1_ref, b1_ref, w2_ref, b2_ref, w3_ref, b3_ref, o_ref):
    # x:(TILE_B, IN) bf16 | w1:(IN, HP) bf16 | w2:(HP, HP) bf16
    # b1,b2,w3:(1, HP) f32 | b3:(1,1) f32 in SMEM | o:(TILE_B, 1) f32
    x = x_ref[...]
    # fc1 + ReLU (MXU matmul, f32 accumulation; epilogue in f32)
    h1 = jnp.dot(x, w1_ref[...], preferred_element_type=jnp.float32)
    h1 = jnp.maximum(h1 + b1_ref[...], 0.0)
    # fc2 + ReLU
    h2 = jnp.dot(h1.astype(jnp.bfloat16), w2_ref[...], preferred_element_type=jnp.float32)
    h2 = jnp.maximum(h2 + b2_ref[...], 0.0)
    # fc3 (N=1): VPU multiply + lane reduction instead of a 1-wide MXU matmul.
    o_ref[...] = jnp.sum(h2 * w3_ref[...], axis=-1, keepdims=True) + b3_ref[0, 0]


def mlp_predictor(x, w1, b1, w2, b2, w3, b3, *, tile_b=512):
    """x: (B, input_size) f32; weights stored transposed vs. PyTorch: w_i (in, out), b_i (1, out),
    w3 (hidden, 1), b3 (1, 1). Returns (B, 1) f32."""
    batch, in_features = x.shape
    hidden = w1.shape[1]
    hp = _round_up(hidden, 128)  # lane-dense hidden width

    # Zero-pad hidden to 128 lanes. Padded units stay exactly 0 through ReLU (zero weights,
    # zero bias) and contribute nothing downstream, so semantics are unchanged.
    w1p = jnp.zeros((in_features, hp), jnp.float32).at[:, :hidden].set(w1).astype(jnp.bfloat16)
    b1p = jnp.zeros((1, hp), jnp.float32).at[:, :hidden].set(b1)
    w2p = jnp.zeros((hp, hp), jnp.float32).at[:hidden, :hidden].set(w2).astype(jnp.bfloat16)
    b2p = jnp.zeros((1, hp), jnp.float32).at[:, :hidden].set(b2)
    w3p = jnp.zeros((1, hp), jnp.float32).at[:, :hidden].set(w3.T)  # row vector for the VPU reduce
    b3p = b3.reshape(1, 1).astype(jnp.float32)

    # Batch tiling: multiple of 16 (bf16 sublane packing), capped at tile_b; pad rows with zeros.
    tb = min(tile_b, _round_up(max(batch, 1), 16))
    b_pad = _round_up(batch, tb)
    xp = jnp.pad(x, ((0, b_pad - batch), (0, 0))).astype(jnp.bfloat16)

    grid = (b_pad // tb,)
    flops = 2 * b_pad * (in_features * hp + hp * hp + hp)
    bytes_accessed = (xp.size * 2 + b_pad * 4 + w1p.size * 2 + w2p.size * 2
                      + (b1p.size + b2p.size + w3p.size + 1) * 4)

    out = pl.pallas_call(
        mlp_kernel,
        out_shape=jax.ShapeDtypeStruct((b_pad, 1), jnp.float32),
        grid=grid,
        in_specs=[
            pl.BlockSpec((tb, in_features), lambda i: (i, 0)),   # x: streamed over batch
            pl.BlockSpec((in_features, hp), lambda i: (0, 0)),   # w1: resident
            pl.BlockSpec((1, hp), lambda i: (0, 0)),             # b1
            pl.BlockSpec((hp, hp), lambda i: (0, 0)),            # w2
            pl.BlockSpec((1, hp), lambda i: (0, 0)),             # b2
            pl.BlockSpec((1, hp), lambda i: (0, 0)),             # w3 row
            pl.BlockSpec(memory_space=pltpu.MemorySpace.SMEM),   # b3 scalar (SMEM, no VMEM tile)
        ],
        out_specs=pl.BlockSpec((tb, 1), lambda i: (i, 0)),
        compiler_params=pltpu.CompilerParams(
            dimension_semantics=("parallel",),          # batch tiles shard across v7x's 2 TCs
            vmem_limit_bytes=32 * 1024 * 1024,          # explicit budget; fits v7x's 64 MiB VMEM
        ),
        cost_estimate=pl.CostEstimate(
            flops=flops, transcendentals=0, bytes_accessed=bytes_accessed),
    )(xp, w1p, b1p, w2p, b2p, w3p, b3p)
    return out[:batch]


def init_params(key, input_size, hidden_size=64):
    """Deterministic synthetic init (matches nn.Linear shapes, stored transposed)."""
    ks = jax.random.split(key, 6)

    def uniform(k, shape, fan_in):
        bound = 1.0 / jnp.sqrt(fan_in)
        return jax.random.uniform(k, shape, jnp.float32, -bound, bound)

    w1 = uniform(ks[0], (input_size, hidden_size), input_size)
    b1 = uniform(ks[1], (1, hidden_size), input_size)
    w2 = uniform(ks[2], (hidden_size, hidden_size), hidden_size)
    b2 = uniform(ks[3], (1, hidden_size), hidden_size)
    w3 = uniform(ks[4], (hidden_size, 1), hidden_size)
    b3 = uniform(ks[5], (1, 1), hidden_size)
    return w1, b1, w2, b2, w3, b3


if __name__ == "__main__":
    key = jax.random.PRNGKey(0)
    k_x, k_p = jax.random.split(key)

    batch, input_size, hidden_size = 8, 32, 64
    x = jax.random.normal(k_x, (batch, input_size), jnp.float32)
    params = init_params(k_p, input_size, hidden_size)

    out = mlp_predictor(x, *params)
    out = jax.block_until_ready(out)

    # Pure-JAX f32 reference (same math as the PyTorch forward). Kernel uses bf16 MXU
    # operands with f32 accumulation, so tolerance is loosened accordingly.
    w1, b1, w2, b2, w3, b3 = params
    ref = jnp.maximum(x @ w1 + b1, 0.0)
    ref = jnp.maximum(ref @ w2 + b2, 0.0)
    ref = ref @ w3 + b3
    assert out.shape == (batch, 1)
    max_err = float(jnp.max(jnp.abs(out - ref)))
    assert jnp.allclose(out, ref, atol=5e-2, rtol=5e-2), f"max abs err {max_err}"

    print("KERNEL_OK")
</pallas_src>

<mosaic_0001>
module attributes {stable_mosaic.version = 11 : i64} {
  func.func @mlp_kernel(%arg0: i32, %arg1: memref<16x32xbf16, #tpu.memory_space<vmem>>, %arg2: memref<32x128xbf16, #tpu.memory_space<vmem>>, %arg3: memref<1x128xf32, #tpu.memory_space<vmem>>, %arg4: memref<128x128xbf16, #tpu.memory_space<vmem>>, %arg5: memref<1x128xf32, #tpu.memory_space<vmem>>, %arg6: memref<1x128xf32, #tpu.memory_space<vmem>>, %arg7: memref<1x1xf32, #tpu.memory_space<smem>>, %arg8: memref<16x1xf32, #tpu.memory_space<vmem>>) attributes {dimension_semantics = [#tpu.dimension_semantics<parallel>], iteration_bounds = array<i64: 1>, scalar_prefetch = 0 : i64, scratch_operands = 0 : i64, tpu.core_type = #tpu.core_type<tc>, window_params = [{transform_indices = @transform_0, window_bounds = array<i64: 16, 32>}, {pipeline_mode = #tpu.pipeline_mode<synchronous>, transform_indices = @transform_1, window_bounds = array<i64: 32, 128>}, {pipeline_mode = #tpu.pipeline_mode<synchronous>, transform_indices = @transform_2, window_bounds = array<i64: 1, 128>}, {pipeline_mode = #tpu.pipeline_mode<synchronous>, transform_indices = @transform_3, window_bounds = array<i64: 128, 128>}, {pipeline_mode = #tpu.pipeline_mode<synchronous>, transform_indices = @transform_4, window_bounds = array<i64: 1, 128>}, {pipeline_mode = #tpu.pipeline_mode<synchronous>, transform_indices = @transform_5, window_bounds = array<i64: 1, 128>}, {transform_indices = @transform_6, window_bounds = array<i64: 1, 1>}, {transform_indices = @transform_7, window_bounds = array<i64: 16, 1>}]} {
    %c0 = arith.constant 0 : index
    %c0_0 = arith.constant 0 : index
    %0 = vector.load %arg1[%c0, %c0_0] : memref<16x32xbf16, #tpu.memory_space<vmem>>, vector<16x32xbf16>
    %c0_1 = arith.constant 0 : index
    %c0_2 = arith.constant 0 : index
    %1 = vector.load %arg2[%c0_1, %c0_2] : memref<32x128xbf16, #tpu.memory_space<vmem>>, vector<32x128xbf16>
    %cst = arith.constant dense<0.000000e+00> : vector<16x128xf32>
    %2 = tpu.matmul %0, %1, %cst {dimension_numbers = #tpu.dot_dimension_numbers<[1], [0], [0], [1], [0, 0, 1, 1], [], []>} : vector<16x32xbf16>, vector<32x128xbf16>, vector<16x128xf32> -> vector<16x128xf32>
    %c0_3 = arith.constant 0 : index
    %c0_4 = arith.constant 0 : index
    %3 = vector.load %arg3[%c0_3, %c0_4] : memref<1x128xf32, #tpu.memory_space<vmem>>, vector<1x128xf32>
    %4 = vector.broadcast %3 : vector<1x128xf32> to vector<16x128xf32>
    %5 = arith.addf %2, %4 : vector<16x128xf32>
    %cst_5 = arith.constant 0.000000e+00 : f32
    %6 = vector.broadcast %cst_5 : f32 to vector<16x128xf32>
    %7 = arith.maximumf %5, %6 : vector<16x128xf32>
    %8 = arith.truncf %7 : vector<16x128xf32> to vector<16x128xbf16>
    %c0_6 = arith.constant 0 : index
    %c0_7 = arith.constant 0 : index
    %9 = vector.load %arg4[%c0_6, %c0_7] : memref<128x128xbf16, #tpu.memory_space<vmem>>, vector<128x128xbf16>
    %cst_8 = arith.constant dense<0.000000e+00> : vector<16x128xf32>
    %10 = tpu.matmul %8, %9, %cst_8 {dimension_numbers = #tpu.dot_dimension_numbers<[1], [0], [0], [1], [0, 0, 1, 1], [], []>} : vector<16x128xbf16>, vector<128x128xbf16>, vector<16x128xf32> -> vector<16x128xf32>
    %c0_9 = arith.constant 0 : index
    %c0_10 = arith.constant 0 : index
    %11 = vector.load %arg5[%c0_9, %c0_10] : memref<1x128xf32, #tpu.memory_space<vmem>>, vector<1x128xf32>
    %12 = vector.broadcast %11 : vector<1x128xf32> to vector<16x128xf32>
    %13 = arith.addf %10, %12 : vector<16x128xf32>
    %cst_11 = arith.constant 0.000000e+00 : f32
    %14 = vector.broadcast %cst_11 : f32 to vector<16x128xf32>
    %15 = arith.maximumf %13, %14 : vector<16x128xf32>
    %c0_12 = arith.constant 0 : index
    %c0_13 = arith.constant 0 : index
    %16 = vector.load %arg6[%c0_12, %c0_13] : memref<1x128xf32, #tpu.memory_space<vmem>>, vector<1x128xf32>
    %17 = vector.broadcast %16 : vector<1x128xf32> to vector<16x128xf32>
    %18 = arith.mulf %15, %17 : vector<16x128xf32>
    %cst_14 = arith.constant dense<0.000000e+00> : vector<16xf32>
    %19 = vector.multi_reduction <add>, %18, %cst_14 [1] : vector<16x128xf32> to vector<16xf32>
    %20 = vector.shape_cast %19 : vector<16xf32> to vector<16x1xf32>
    %c0_15 = arith.constant 0 : index
    %c0_16 = arith.constant 0 : index
    %21 = memref.load %arg7[%c0_15, %c0_16] : memref<1x1xf32, #tpu.memory_space<smem>>
    %22 = vector.broadcast %21 : f32 to vector<16x1xf32>
    %23 = arith.addf %20, %22 : vector<16x1xf32>
    %c0_17 = arith.constant 0 : index
    %c0_18 = arith.constant 0 : index
    %24 = vector.load %arg8[%c0_17, %c0_18] : memref<16x1xf32, #tpu.memory_space<vmem>>, vector<16x1xf32>
    tpu.vector_store %arg8[%c0_17, %c0_18], %23 {strides = array<i32>} : memref<16x1xf32, #tpu.memory_space<vmem>>, vector<16x1xf32>,
    return
  }
  func.func @transform_0(%arg0: i32) -> (i32, i32) {
    %c0_i32 = arith.constant 0 : i32
    %c0_i32_0 = arith.constant 0 : i32
    return %arg0, %c0_i32 : i32, i32
  }
  func.func @transform_1(%arg0: i32) -> (i32, i32) {
    %c0_i32 = arith.constant 0 : i32
    %c0_i32_0 = arith.constant 0 : i32
    %c0_i32_1 = arith.constant 0 : i32
    return %c0_i32, %c0_i32_0 : i32, i32
  }
  func.func @transform_2(%arg0: i32) -> (i32, i32) {
    %c0_i32 = arith.constant 0 : i32
    %c0_i32_0 = arith.constant 0 : i32
    %c0_i32_1 = arith.constant 0 : i32
    return %c0_i32, %c0_i32_0 : i32, i32
  }
  func.func @transform_3(%arg0: i32) -> (i32, i32) {
    %c0_i32 = arith.constant 0 : i32
    %c0_i32_0 = arith.constant 0 : i32
    %c0_i32_1 = arith.constant 0 : i32
    return %c0_i32, %c0_i32_0 : i32, i32
  }
  func.func @transform_4(%arg0: i32) -> (i32, i32) {
    %c0_i32 = arith.constant 0 : i32
    %c0_i32_0 = arith.constant 0 : i32
    %c0_i32_1 = arith.constant 0 : i32
    return %c0_i32, %c0_i32_0 : i32, i32
  }
  func.func @transform_5(%arg0: i32) -> (i32, i32) {
    %c0_i32 = arith.constant 0 : i32
    %c0_i32_0 = arith.constant 0 : i32
    %c0_i32_1 = arith.constant 0 : i32
    return %c0_i32, %c0_i32_0 : i32, i32
  }
  func.func @transform_6(%arg0: i32) -> (i32, i32) {
    %c0_i32 = arith.constant 0 : i32
    %c0_i32_0 = arith.constant 0 : i32
    %c0_i32_1 = arith.constant 0 : i32
    return %c0_i32, %c0_i32_0 : i32, i32
  }
  func.func @transform_7(%arg0: i32) -> (i32, i32) {
    %c0_i32 = arith.constant 0 : i32
    %c0_i32_0 = arith.constant 0 : i32
    return %arg0, %c0_i32 : i32, i32
  }
}

</mosaic_0001>

<llo_original>
// kernel: tpu_custom_call.1
$region0: #{tpu_custom_call.1}
  #allocation0 [shape = 'u32[]', space=smem, size = 0x4, offset = 0x4, fixed_abs, tag = 'smem constant byte address 0x4 - core index']
  #allocation1 [shape = 'u32[72,128]{1,0:T(1,128)}', space=vmem, size = 0x9000, scoped, tag = 'internal scratch']
  #allocation2 [shape = 'f32[1,1]{1,0:T(1,128)S(6)}', space=smem, size = 0x200, scoped, tag = 'scoped memory for tpu_custom_call.1']
  %s0 = inlined_call_operand.hbm [shape: bf16[16,32], index: 0, kind: input, shape index: {}]
  %s1 = inlined_call_operand.hbm [shape: bf16[32,128], index: 1, kind: input, shape index: {}]
  %s2 = inlined_call_operand.vmem [shape: f32[1,128], index: 2, kind: input, shape index: {}]
  %s3 = inlined_call_operand.hbm [shape: bf16[128,128], index: 3, kind: input, shape index: {}]
  %s4 = inlined_call_operand.vmem [shape: f32[1,128], index: 4, kind: input, shape index: {}]
  %s5 = inlined_call_operand.vmem [shape: f32[1,128], index: 5, kind: input, shape index: {}]
  %s6 = inlined_call_operand.<no memory space> [shape: f32[1,1], index: 6, kind: input, shape index: {}]
  %s7 = inlined_call_operand.vmem [shape: f32[16,1], index: 7, kind: output, shape index: {}]
  %s8 = sld [smem:[#allocation0]]
  $region50: #{tpu_custom_call.1} parent=0
    _
  %s10 = ssub.s32 1, %s8
  %s11 = scalar_select 0, %s10, %s8
  %12 = sst [smem:[#allocation2]] %s6
  $region1: #{tpu_custom_call.1} parent=0
    #allocation3 [shape = 'u8[4096]{0}', space=vmem, size = 0x1000, scoped, tag = 'input window, operand 0, single buffered']
    #allocation4 [shape = 's32[1]{0}', space=sflag, size = 0x4, scoped, tag = 'scoped memory for tpu_custom_call.1']
    #allocation5 [shape = 'u8[8192]{0}', space=vmem, size = 0x2000, scoped, tag = 'input window, operand 1, single buffered']
    #allocation6 [shape = 's32[1]{0}', space=sflag, size = 0x4, scoped, tag = 'scoped memory for tpu_custom_call.1']
    #allocation7 [shape = 'u8[32768]{0}', space=vmem, size = 0x8000, scoped, tag = 'input window, operand 3, single buffered']
    %13 = vsyncpa [#allocation4], 0
    %14 = vsyncpa [#allocation6], 0
    // Predicated region
    $region2: #{tpu_custom_call.1} parent=1 // pred_check
      _
    $region3: #{tpu_custom_call.1} parent=1 // pred_check_branch
      %16 = sbr.rel (0) target = $region5
    $region4: #{tpu_custom_call.1} parent=1 // pred_region
      %18 = vsyncadd [#allocation4], 0
      %s19 = sshll.u32 %s0, 4
      %s20 = int_to_ptr.hbm [resolvable:$true] %s19
      %s21 = sshll.u32 [#allocation3], 4
      %s22 = int_to_ptr.vmem [resolvable:$true] %s21
      %27 = dma.hbm_to_vmem [thread:$0]  %s20, 128, %s22, [#allocation4], 64, 64, 4
    $region5: #{tpu_custom_call.1} parent=1 // pred_fallthru
      _
    // Predicated region
    $region6: #{tpu_custom_call.1} parent=1 // pred_check
      _
    $region7: #{tpu_custom_call.1} parent=1 // pred_check_branch
      %29 = sbr.rel (0) target = $region9
    $region8: #{tpu_custom_call.1} parent=1 // pred_region
      %31 = vsyncadd [#allocation6], 0
      %s32 = sshll.u32 %s1, 4
      %s33 = int_to_ptr.hbm [resolvable:$true] %s32
      %s34 = sshll.u32 [#allocation5], 4
      %s35 = int_to_ptr.vmem [resolvable:$true] %s34
      %40 = dma.hbm_to_vmem [thread:$0]  %s33, 256, %s35, [#allocation6], 64, 64, 4
    $region9: #{tpu_custom_call.1} parent=1 // pred_fallthru
      _
    // Predicated region
    $region10: #{tpu_custom_call.1} parent=1 // pred_check
      _
    $region11: #{tpu_custom_call.1} parent=1 // pred_check_branch
      %42 = sbr.rel (0) target = $region13
    $region12: #{tpu_custom_call.1} parent=1 // pred_region
      _
    $region13: #{tpu_custom_call.1} parent=1 // pred_fallthru
      _
    // Predicated region
    $region14: #{tpu_custom_call.1} parent=1 // pred_check
      _
    $region15: #{tpu_custom_call.1} parent=1 // pred_check_branch
      %44 = sbr.rel (0) target = $region17
    $region16: #{tpu_custom_call.1} parent=1 // pred_region
      %46 = vsyncadd [#allocation6], 0
      %s47 = sshll.u32 %s3, 4
      %s48 = int_to_ptr.hbm [resolvable:$true] %s47
      %s49 = sshll.u32 [#allocation7], 4
      %s50 = int_to_ptr.vmem [resolvable:$true] %s49
      %55 = dma.hbm_to_vmem [thread:$0]  %s48, 1024, %s50, [#allocation6], 64, 64, 4
    $region17: #{tpu_custom_call.1} parent=1 // pred_fallthru
      _
    // Predicated region
    $region18: #{tpu_custom_call.1} parent=1 // pred_check
      _
    $region19: #{tpu_custom_call.1} parent=1 // pred_check_branch
      %57 = sbr.rel (0) target = $region21
    $region20: #{tpu_custom_call.1} parent=1 // pred_region
      _
    $region21: #{tpu_custom_call.1} parent=1 // pred_fallthru
      _
    // Predicated region
    $region22: #{tpu_custom_call.1} parent=1 // pred_check
      _
    $region23: #{tpu_custom_call.1} parent=1 // pred_check_branch
      %59 = sbr.rel (0) target = $region25
    $region24: #{tpu_custom_call.1} parent=1 // pred_region
      _
    $region25: #{tpu_custom_call.1} parent=1 // pred_fallthru
      _
    // Predicated region
    $region26: #{tpu_custom_call.1} parent=1 // pred_check
      _
    $region27: #{tpu_custom_call.1} parent=1 // pred_check_branch
      %61 = sbr.rel (0) target = $region29
    $region28: #{tpu_custom_call.1} parent=1 // pred_region
      _
    $region29: #{tpu_custom_call.1} parent=1 // pred_fallthru
      _
    // Predicated region
    $region30: #{tpu_custom_call.1} parent=1 // pred_check
      _
    $region31: #{tpu_custom_call.1} parent=1 // pred_check_branch
      %63 = sbr.rel (0) target = $region33
    $region32: #{tpu_custom_call.1} parent=1 // pred_region
      %65 = dma.done [#allocation4], 128
    $region33: #{tpu_custom_call.1} parent=1 // pred_fallthru
      _
    // Predicated region
    $region34: #{tpu_custom_call.1} parent=1 // pred_check
      _
    $region35: #{tpu_custom_call.1} parent=1 // pred_check_branch
      %67 = sbr.rel (0) target = $region37
    $region36: #{tpu_custom_call.1} parent=1 // pred_region
      %69 = dma.done [#allocation6], 256
    $region37: #{tpu_custom_call.1} parent=1 // pred_fallthru
      _
    // Predicated region
    $region38: #{tpu_custom_call.1} parent=1 // pred_check
      _
    $region39: #{tpu_custom_call.1} parent=1 // pred_check_branch
      %71 = sbr.rel (0) target = $region41
    $region40: #{tpu_custom_call.1} parent=1 // pred_region
      %73 = dma.done [#allocation6], 1024
    $region41: #{tpu_custom_call.1} parent=1 // pred_fallthru
      _
    %v75 = vld [vmem:[#allocation3] sm:$0xf]
    %v76 = vld [vmem:[#allocation3 + $0x4] sm:$0xf]
    %v77 = vld [vmem:[#allocation5] sm:$0xf]
    %v78 = vld [vmem:[#allocation5 + $0x4] sm:$0xf]
    %v79 = vld [vmem:[#allocation5 + $0x8] sm:$0xf]
    %v80 = vld [vmem:[#allocation5 + $0xc] sm:$0xf]
    %v81 = vld [vmem:[%s2] sm:$0x1]
    %v83 = vperm.slane %v81, 0
    %v87 = vunpack.c.l.b16 %v75
    %v88 = vunpack.c.l.b16 %v76
    %v89 = vpack.c.b16 %v88, %v87
    %v94 = vunpack.c.l.b16 %v77
    %v95 = vunpack.c.l.b16 %v78
    %v96 = vunpack.c.l.b16 %v79
    %v97 = vunpack.c.l.b16 %v80
    %v98 = vpack.c.b16 %v95, %v94
    %v99 = vpack.c.b16 %v97, %v96
    %vm102 = vcmask 261120
    %v104 = vsel %vm102, %v89, 0
    %106 = vmatpush.bf16.msra.mxu0 0
    %107 = vmatpush.bf16.msra.mxu0 0
    %108 = vmatpush.bf16.msra.mxu0 0
    %109 = vmatpush.bf16.msra.mxu0 0
    %110 = vmatpush.bf16.msra.mxu0 0
    %111 = vmatpush.bf16.msra.mxu0 0
    %112 = vmatpush.bf16.msra.mxu0 %v99
    %113 = vmatpush.bf16.msra.mxu0 %v98
    %114 = vmatmul.bf16.gmra.mxu0 %v104
    %v115 = vpop.f32.mrf.mxu0
    %v116 = vadd.f32 %v83, %v115
    %v117 = vpop.f32.mrf.mxu0
    %v118 = vadd.f32 %v83, %v117
    %119 = vdwg.mxu0
    %v120 = vmax.f32 %v116, 0.0
    %v121 = vmax.f32 %v118, 0.0
    %v122 = vpack.c.bf16 %v121, %v120
    %v123 = vld [vmem:[#allocation7] sm:$0xf]
    %v124 = vld [vmem:[#allocation7 + $0x4] sm:$0xf]
    %v125 = vld [vmem:[#allocation7 + $0x8] sm:$0xf]
    %v126 = vld [vmem:[#allocation7 + $0xc] sm:$0xf]
    %v127 = vld [vmem:[#allocation7 + $0x10] sm:$0xf]
    %v128 = vld [vmem:[#allocation7 + $0x14] sm:$0xf]
    %v129 = vld [vmem:[#allocation7 + $0x18] sm:$0xf]
    %v130 = vld [vmem:[#allocation7 + $0x1c] sm:$0xf]
    %v131 = vld [vmem:[#allocation7 + $0x20] sm:$0xf]
    %v132 = vld [vmem:[#allocation7 + $0x24] sm:$0xf]
    %v133 = vld [vmem:[#allocation7 + $0x28] sm:$0xf]
    %v134 = vld [vmem:[#allocation7 + $0x2c] sm:$0xf]
    %v135 = vld [vmem:[#allocation7 + $0x30] sm:$0xf]
    %v136 = vld [vmem:[#allocation7 + $0x34] sm:$0xf]
    %v137 = vld [vmem:[#allocation7 + $0x38] sm:$0xf]
    %v138 = vld [vmem:[#allocation7 + $0x3c] sm:$0xf]
    %v139 = vld [vmem:[%s4] sm:$0x1]
    %v141 = vperm.slane %v139, 0
    %v159 = vunpack.c.l.b16 %v123
    %v160 = vunpack.c.l.b16 %v124
    %v161 = vunpack.c.l.b16 %v125
    %v162 = vunpack.c.l.b16 %v126
    %v163 = vunpack.c.l.b16 %v127
    %v164 = vunpack.c.l.b16 %v128
    %v165 = vunpack.c.l.b16 %v129
    %v166 = vunpack.c.l.b16 %v130
    %v167 = vunpack.c.l.b16 %v131
    %v168 = vunpack.c.l.b16 %v132
    %v169 = vunpack.c.l.b16 %v133
    %v170 = vunpack.c.l.b16 %v134
    %v171 = vunpack.c.l.b16 %v135
    %v172 = vunpack.c.l.b16 %v136
    %v173 = vunpack.c.l.b16 %v137
    %v174 = vunpack.c.l.b16 %v138
    %v175 = vpack.c.b16 %v160, %v159
    %v176 = vpack.c.b16 %v162, %v161
    %v177 = vpack.c.b16 %v164, %v163
    %v178 = vpack.c.b16 %v166, %v165
    %v179 = vpack.c.b16 %v168, %v167
    %v180 = vpack.c.b16 %v170, %v169
    %v181 = vpack.c.b16 %v172, %v171
    %v182 = vpack.c.b16 %v174, %v173
    %191 = vmatpush.bf16.msra.mxu0 %v182
    %192 = vmatpush.bf16.msra.mxu0 %v181
    %193 = vmatpush.bf16.msra.mxu0 %v180
    %194 = vmatpush.bf16.msra.mxu0 %v179
    %195 = vmatpush.bf16.msra.mxu0 %v178
    %196 = vmatpush.bf16.msra.mxu0 %v177
    %197 = vmatpush.bf16.msra.mxu0 %v176
    %198 = vmatpush.bf16.msra.mxu0 %v175
    %199 = vmatmul.bf16.gmra.mxu0 %v122
    %v200 = vpop.f32.mrf.mxu0
    %v201 = vadd.f32 %v141, %v200
    %v202 = vpop.f32.mrf.mxu0
    %v203 = vadd.f32 %v141, %v202
    %204 = vdwg.mxu0
    %v205 = vmax.f32 %v201, 0.0
    %v206 = vmax.f32 %v203, 0.0
    %v207 = vld [vmem:[%s5] sm:$0x1]
    %v209 = vperm.slane %v207, 0
    %v211 = vmul.f32 %v205, %v209
    %v212 = vmul.f32 %v206, %v209
    %213 = vadd.xlane.f32.xlu0 %v211
    %v214 = vpop.xlane.xlu0 %213
    %215 = vadd.xlane.f32.xlu0 %v212
    %v216 = vpop.xlane.xlu0 %215
    %s217 = sld [smem:[#allocation2]]
    %v218 = vstv %s217
    %v219 = vadd.f32 %v214, %v218
    %v220 = vadd.f32 %v216, %v218
    %vm221 = vcmask 7168
    %222 = vst.msk [vmem:[%s7] sm:$0xff] %vm221, %v219
    %223 = vst.msk [vmem:[%s7 + $0x8] sm:$0xff] %vm221, %v220
    // Predicated region
    $region42: #{tpu_custom_call.1} parent=1 // pred_check
      _
    $region43: #{tpu_custom_call.1} parent=1 // pred_check_branch
      %225 = sbr.rel (0) target = $region45
    $region44: #{tpu_custom_call.1} parent=1 // pred_region
      _
    $region45: #{tpu_custom_call.1} parent=1 // pred_fallthru
      _
    // Predicated region
    $region46: #{tpu_custom_call.1} parent=1 // pred_check
      _
    $region47: #{tpu_custom_call.1} parent=1 // pred_check_branch
      %227 = sbr.rel (0) target = $region49
    $region48: #{tpu_custom_call.1} parent=1 // pred_region
      _
    $region49: #{tpu_custom_call.1} parent=1 // pred_fallthru
      _
    %228 = vsyncpa [#allocation4], 1
    %229 = vsyncpa [#allocation6], 1

</llo_original>
